<compile_context>
chip_gen: v7x
topology: tpu7x:2x2x1
jax: 0.10.0
libtpu: 0.0.40
codegen_flags: <defaults>
</compile_context>

<pallas_src>
import functools

import jax
import jax.numpy as jnp
from jax.experimental import pallas as pl
from jax.experimental.pallas import tpu as pltpu

ALPHA = 0.6
BETA = 0.3
GAMMA = 0.1
SCALE_PERCEPT = 0.01
EPS = 1e-6

NUM_SPLITS = 2   # leading "parallel" grid axis -> both TensorCores on v7x
LANE = 128
SUBLANE = 8


def _loss_kernel(out_spec_ref, tgt_spec_ref, pred_ref, tgt_params_ref, mel_fb_ref,
                 spec_sum_ref, mel_sum_ref, param_sum_ref,
                 spec_acc, mel_acc,
                 *, n_rows, f_pad, n_mels_pad):
    c = pl.program_id(0)
    k = pl.program_id(1)
    nk = pl.num_programs(1)

    # --- init vector accumulators once per split ------------------------------
    @pl.when(k == 0)
    def _():
        spec_acc[...] = jnp.zeros_like(spec_acc)
        mel_acc[...] = jnp.zeros_like(mel_acc)

    # --- hot loop: clamp, diff, lane-parallel partial sums (VPU adds only) ----
    o = jnp.maximum(out_spec_ref[...].astype(jnp.float32), EPS)   # (n_rows, t_tile)
    t = jnp.maximum(tgt_spec_ref[...].astype(jnp.float32), EPS)
    d = o - t
    a = jnp.abs(d)
    # Fold sublane-tile groups with elementwise vreg adds; the cross-lane reduce
    # is deferred to the finalize step.  (n_rows % 8 == 0 guaranteed by wrapper.)
    spec_acc[...] += jnp.sum(a.reshape(n_rows // SUBLANE, SUBLANE, -1), axis=0)

    # Perceptual term on the [batch 0, channel 0] slice (rows [0:F]); matmul
    # linearity: fb @ (o - t) == fb @ o - fb @ t, reusing the diff.  fb's padded
    # rows/cols are zero, so padding contributes nothing.
    fb = mel_fb_ref[...].astype(jnp.float32)                       # (n_mels_pad, f_pad)
    mel_d = jnp.dot(fb, d[0:f_pad, :], preferred_element_type=jnp.float32)
    mel_acc[...] += jnp.sum(jnp.abs(mel_d).reshape(n_mels_pad // SUBLANE, SUBLANE, -1),
                            axis=0)

    # --- finalize per split: one cross-lane reduce, store raw sums ------------
    @pl.when(k == nk - 1)
    def _():
        spec_sum_ref[...] = jnp.sum(spec_acc[...]).reshape(1, 1, 1)
        mel_sum_ref[...] = jnp.sum(mel_acc[...]).reshape(1, 1, 1)
        pd = (pred_ref[...] - tgt_params_ref[...]).astype(jnp.float32)
        psum = jnp.sum(pd * pd)
        # Only split 0 contributes the (tiny) parameter-MSE sum.
        param_sum_ref[...] = jnp.where(c == 0, psum, 0.0).reshape(1, 1, 1)


def _round_up(x, m):
    return (x + m - 1) // m * m


def _vmem_capacity_bytes():
    try:
        info = pltpu.get_tpu_info()
        for attr in ("vmem_capacity_bytes", "vmem_size_bytes", "vmem_bytes"):
            v = getattr(info, attr, None)
            if v:
                return int(v)
    except Exception:
        pass
    return 64 << 20   # conservative (v7x-sized) default if the query fails


def _live_set_bytes(n_rows, t_tile, itemsize):
    """2 inputs x double-buffered DMA (wire dtype) + ~3 f32 temporaries + slack."""
    wire_tile = n_rows * t_tile * itemsize
    f32_tile = n_rows * t_tile * 4
    return 4 * wire_tile + 3 * f32_tile + (3 << 20)


def _pick_t_tile(t_half, n_rows, itemsize, target_bytes):
    """Largest multiple-of-128 tile dividing t_half whose live set fits the budget."""
    fixed = 3 << 20
    per_block = _live_set_bytes(n_rows, LANE, itemsize) - fixed   # bytes per 128 lanes
    max_blocks = max(1, (target_bytes - fixed) // max(per_block, 1))
    t = min(t_half, max_blocks * LANE)
    t = max(LANE, (t // LANE) * LANE)
    while t > LANE and t_half % t != 0:
        t -= LANE
    return t


def audio_mastering_loss(output_spec, target_spec, predicted_params, target_params,
                         mel_fb, *, t_tile=None):
    """Returns (total_loss, components_dict) like the PyTorch module."""
    B, C, F, T = output_spec.shape
    Bp, P = predicted_params.shape
    n_mels, Fm = mel_fb.shape
    assert Fm == F and Bp == B and target_spec.shape == output_spec.shape

    itemsize = jnp.dtype(output_spec.dtype).itemsize

    # ---- flatten (B, C, F) -> one row axis (free reshape of contiguous dims) ----
    n_rows = B * C * F
    n_rows_pad = _round_up(n_rows, SUBLANE)
    out2d = output_spec.reshape(n_rows, T)
    tgt2d = target_spec.reshape(n_rows, T)

    # ---- pad so both splits get lane-dense 128-multiple tiles -------------------
    T_pad = _round_up(T, LANE * NUM_SPLITS)
    pad_rows = n_rows_pad - n_rows
    pad_t = T_pad - T
    if pad_rows or pad_t:
        # Identical zero padding on both spectrograms: clamp() maps both to EPS,
        # so the padded region contributes exactly 0 to |o - t| and to the mel term.
        out2d = jnp.pad(out2d, ((0, pad_rows), (0, pad_t)))
        tgt2d = jnp.pad(tgt2d, ((0, pad_rows), (0, pad_t)))

    # ---- zero-pad the mel filterbank to sublane-friendly dims -------------------
    f_pad = _round_up(F, SUBLANE)               # always <= n_rows_pad
    n_mels_pad = _round_up(n_mels, SUBLANE)
    fb = jnp.zeros((n_mels_pad, f_pad), jnp.float32).at[:n_mels, :F].set(
        mel_fb.astype(jnp.float32))

    # ---- generation-aware tile selection & VMEM sizing --------------------------
    T_half = T_pad // NUM_SPLITS
    big_vmem = _vmem_capacity_bytes() > (96 << 20)      # v5e/v6e (128 MiB) vs v7x (64 MiB)
    target = (56 << 20) if big_vmem else (40 << 20)
    if t_tile is None or T_half % t_tile != 0 or t_tile % LANE != 0:
        t_tile = _pick_t_tile(T_half, n_rows_pad, itemsize, target)
    nk = T_half // t_tile

    live = _live_set_bytes(n_rows_pad, t_tile, itemsize)
    vmem_limit = int(min((64 << 20) if big_vmem else (44 << 20),
                         max(16 << 20, live)))

    kernel = functools.partial(
        _loss_kernel, n_rows=n_rows_pad, f_pad=f_pad, n_mels_pad=n_mels_pad)

    out_shape = jax.ShapeDtypeStruct((NUM_SPLITS, 1, 1), jnp.float32)
    spec_block = pl.BlockSpec((n_rows_pad, t_tile), lambda c, k: (0, c * nk + k))
    param_block = pl.BlockSpec((B, P), lambda c, k: (0, 0))
    fb_block = pl.BlockSpec((n_mels_pad, f_pad), lambda c, k: (0, 0))
    out_block = pl.BlockSpec((1, 1, 1), lambda c, k: (c, 0, 0))

    cost = pl.CostEstimate(
        flops=2 * n_mels_pad * f_pad * T_pad + 6 * n_rows_pad * T_pad,
        transcendentals=0,
        bytes_accessed=2 * n_rows_pad * T_pad * itemsize
                       + 2 * B * P * 4 + n_mels_pad * f_pad * 4 + 3 * NUM_SPLITS * 4,
    )

    spec_sums, mel_sums, param_sums = pl.pallas_call(
        kernel,
        out_shape=(out_shape, out_shape, out_shape),
        grid_spec=pltpu.PrefetchScalarGridSpec(
            num_scalar_prefetch=0,
            grid=(NUM_SPLITS, nk),
            in_specs=[spec_block, spec_block, param_block, param_block, fb_block],
            out_specs=(out_block, out_block, out_block),
            scratch_shapes=[pltpu.VMEM((SUBLANE, t_tile), jnp.float32),
                            pltpu.VMEM((SUBLANE, t_tile), jnp.float32)],
        ),
        compiler_params=pltpu.CompilerParams(
            dimension_semantics=("parallel", "arbitrary"),
            vmem_limit_bytes=vmem_limit,
        ),
        cost_estimate=cost,
    )(out2d, tgt2d, predicted_params, target_params, fb)

    # ---- wrapper finalize (4 scalars): combine splits, divide by TRUE counts ----
    spec_l1 = jnp.sum(spec_sums) / float(B * C * F * T)
    param_mse = jnp.sum(param_sums) / float(B * P)
    percept = jnp.sum(mel_sums) * (SCALE_PERCEPT / float(n_mels * T))
    total = ALPHA * spec_l1 + BETA * param_mse + GAMMA * percept
    components = {
        "spec_loss_l1": spec_l1,
        "parameter_loss": param_mse,
        "perceptual_loss": percept,
        "total_loss": total,
    }
    return total, components


def make_mel_filterbank(n_mels, n_freq):
    """Deterministic triangular 'mel-like' filterbank of shape (n_mels, n_freq)."""
    freqs = jnp.arange(n_freq, dtype=jnp.float32)
    centers = jnp.linspace(0.0, float(n_freq - 1), n_mels + 2)
    lo, ce, hi = centers[:-2], centers[1:-1], centers[2:]
    up = (freqs[None, :] - lo[:, None]) / jnp.maximum(ce - lo, 1e-6)[:, None]
    down = (hi[:, None] - freqs[None, :]) / jnp.maximum(hi - ce, 1e-6)[:, None]
    fb = jnp.clip(jnp.minimum(up, down), 0.0, 1.0)
    return fb.astype(jnp.float32)


if __name__ == "__main__":
    key = jax.random.PRNGKey(0)
    k1, k2, k3, k4 = jax.random.split(key, 4)

    # Small but lane-dense shapes: spectrograms (B, 1, F, T) with T a multiple of
    # 256 so both splits get whole tiles; params (B, P).
    B, C, F, T = 2, 1, 64, 512
    P = 8
    N_MELS = 16

    output_spec = jax.random.uniform(k1, (B, C, F, T), dtype=jnp.float32)
    target_spec = jax.random.uniform(k2, (B, C, F, T), dtype=jnp.float32)
    predicted_params = jax.random.normal(k3, (B, P), dtype=jnp.float32)
    target_params = jax.random.normal(k4, (B, P), dtype=jnp.float32)
    mel_fb = make_mel_filterbank(N_MELS, F)

    # t_tile=128 -> grid (2 splits, 2 steps): exercises both the per-split
    # accumulate path and the pl.when finalize path.
    total_loss, comps = audio_mastering_loss(
        output_spec, target_spec, predicted_params, target_params, mel_fb,
        t_tile=128,
    )
    jax.block_until_ready(total_loss)

    # Pure-JAX reference (same math, outside Pallas).
    o = jnp.maximum(output_spec.astype(jnp.float32), EPS)
    t = jnp.maximum(target_spec.astype(jnp.float32), EPS)
    ref_spec = jnp.mean(jnp.abs(o - t))
    ref_param = jnp.mean((predicted_params - target_params) ** 2)
    ref_percept = jnp.mean(jnp.abs(mel_fb @ o[0, 0] - mel_fb @ t[0, 0])) * SCALE_PERCEPT
    ref_total = ALPHA * ref_spec + BETA * ref_param + GAMMA * ref_percept

    assert jnp.allclose(total_loss, ref_total, rtol=2e-5, atol=1e-6), (total_loss, ref_total)
    assert jnp.allclose(comps["spec_loss_l1"], ref_spec, rtol=2e-5, atol=1e-6)
    assert jnp.allclose(comps["parameter_loss"], ref_param, rtol=2e-5, atol=1e-6)
    assert jnp.allclose(comps["perceptual_loss"], ref_percept, rtol=2e-5, atol=1e-6)

    print("KERNEL_OK")
</pallas_src>

<mosaic_0001>
module attributes {stable_mosaic.version = 11 : i64} {
  func.func @_loss_kernel(%arg0: i32, %arg1: i32, %arg2: memref<128x128xf32, #tpu.memory_space<vmem>>, %arg3: memref<128x128xf32, #tpu.memory_space<vmem>>, %arg4: memref<2x8xf32, #tpu.memory_space<vmem>>, %arg5: memref<2x8xf32, #tpu.memory_space<vmem>>, %arg6: memref<16x64xf32, #tpu.memory_space<vmem>>, %arg7: memref<1x1x1xf32, #tpu.memory_space<vmem>>, %arg8: memref<1x1x1xf32, #tpu.memory_space<vmem>>, %arg9: memref<1x1x1xf32, #tpu.memory_space<vmem>>, %arg10: memref<8x128xf32, #tpu.memory_space<vmem>>, %arg11: memref<8x128xf32, #tpu.memory_space<vmem>>) attributes {dimension_semantics = [#tpu.dimension_semantics<parallel>, #tpu.dimension_semantics<arbitrary>], iteration_bounds = array<i64: 2, 2>, scalar_prefetch = 0 : i64, scratch_operands = 2 : i64, tpu.core_type = #tpu.core_type<tc>, window_params = [{transform_indices = @transform_0, window_bounds = array<i64: 128, 128>}, {transform_indices = @transform_1, window_bounds = array<i64: 128, 128>}, {pipeline_mode = #tpu.pipeline_mode<synchronous>, transform_indices = @transform_2, window_bounds = array<i64: 2, 8>}, {pipeline_mode = #tpu.pipeline_mode<synchronous>, transform_indices = @transform_3, window_bounds = array<i64: 2, 8>}, {pipeline_mode = #tpu.pipeline_mode<synchronous>, transform_indices = @transform_4, window_bounds = array<i64: 16, 64>}, {transform_indices = @transform_5, window_bounds = array<i64: 1, 1, 1>}, {transform_indices = @transform_6, window_bounds = array<i64: 1, 1, 1>}, {transform_indices = @transform_7, window_bounds = array<i64: 1, 1, 1>}]} {
    %c0_i32 = arith.constant 0 : i32
    %0 = arith.cmpi eq, %arg1, %c0_i32 : i32
    %1 = arith.extui %0 : i1 to i32
    %c0_i32_0 = arith.constant 0 : i32
    %2 = arith.cmpi ne, %1, %c0_i32_0 : i32
    scf.if %2 {
      %cst_19 = arith.constant 0.000000e+00 : f32
      %28 = vector.broadcast %cst_19 : f32 to vector<8x128xf32>
      %c0_20 = arith.constant 0 : index
      %c0_21 = arith.constant 0 : index
      %29 = vector.load %arg10[%c0_20, %c0_21] : memref<8x128xf32, #tpu.memory_space<vmem>>, vector<8x128xf32>
      tpu.vector_store %arg10[%c0_20, %c0_21], %28 {strides = array<i32>} : memref<8x128xf32, #tpu.memory_space<vmem>>, vector<8x128xf32>,
      %cst_22 = arith.constant 0.000000e+00 : f32
      %30 = vector.broadcast %cst_22 : f32 to vector<8x128xf32>
      %c0_23 = arith.constant 0 : index
      %c0_24 = arith.constant 0 : index
      %31 = vector.load %arg11[%c0_23, %c0_24] : memref<8x128xf32, #tpu.memory_space<vmem>>, vector<8x128xf32>
      tpu.vector_store %arg11[%c0_23, %c0_24], %30 {strides = array<i32>} : memref<8x128xf32, #tpu.memory_space<vmem>>, vector<8x128xf32>,
    } else {
    }
    %c0 = arith.constant 0 : index
    %c0_1 = arith.constant 0 : index
    %3 = vector.load %arg2[%c0, %c0_1] : memref<128x128xf32, #tpu.memory_space<vmem>>, vector<128x128xf32>
    %cst = arith.constant 9.99999997E-7 : f32
    %4 = vector.broadcast %cst : f32 to vector<128x128xf32>
    %5 = arith.maximumf %3, %4 : vector<128x128xf32>
    %c0_2 = arith.constant 0 : index
    %c0_3 = arith.constant 0 : index
    %6 = vector.load %arg3[%c0_2, %c0_3] : memref<128x128xf32, #tpu.memory_space<vmem>>, vector<128x128xf32>
    %cst_4 = arith.constant 9.99999997E-7 : f32
    %7 = vector.broadcast %cst_4 : f32 to vector<128x128xf32>
    %8 = arith.maximumf %6, %7 : vector<128x128xf32>
    %9 = arith.subf %5, %8 : vector<128x128xf32>
    %10 = math.absf %9 : vector<128x128xf32>
    %c0_5 = arith.constant 0 : index
    %c0_6 = arith.constant 0 : index
    %11 = vector.load %arg10[%c0_5, %c0_6] : memref<8x128xf32, #tpu.memory_space<vmem>>, vector<8x128xf32>
    %12 = vector.shape_cast %10 : vector<128x128xf32> to vector<16x8x128xf32>
    %cst_7 = arith.constant dense<0.000000e+00> : vector<8x128xf32>
    %13 = vector.multi_reduction <add>, %12, %cst_7 [0] : vector<16x8x128xf32> to vector<8x128xf32>
    %14 = arith.addf %11, %13 : vector<8x128xf32>
    %c0_8 = arith.constant 0 : index
    %c0_9 = arith.constant 0 : index
    %15 = vector.load %arg10[%c0_8, %c0_9] : memref<8x128xf32, #tpu.memory_space<vmem>>, vector<8x128xf32>
    tpu.vector_store %arg10[%c0_8, %c0_9], %14 {strides = array<i32>} : memref<8x128xf32, #tpu.memory_space<vmem>>, vector<8x128xf32>,
    %c0_10 = arith.constant 0 : index
    %c0_11 = arith.constant 0 : index
    %16 = vector.load %arg6[%c0_10, %c0_11] : memref<16x64xf32, #tpu.memory_space<vmem>>, vector<16x64xf32>
    %17 = vector.extract_strided_slice %9 {offsets = [0, 0], sizes = [64, 128], strides = [1, 1]} : vector<128x128xf32> to vector<64x128xf32>
    %cst_12 = arith.constant dense<0.000000e+00> : vector<16x128xf32>
    %18 = tpu.matmul %16, %17, %cst_12 {dimension_numbers = #tpu.dot_dimension_numbers<[1], [0], [0], [1], [0, 0, 1, 1], [], []>} : vector<16x64xf32>, vector<64x128xf32>, vector<16x128xf32> -> vector<16x128xf32>
    %c0_13 = arith.constant 0 : index
    %c0_14 = arith.constant 0 : index
    %19 = vector.load %arg11[%c0_13, %c0_14] : memref<8x128xf32, #tpu.memory_space<vmem>>, vector<8x128xf32>
    %20 = math.absf %18 : vector<16x128xf32>
    %21 = vector.shape_cast %20 : vector<16x128xf32> to vector<2x8x128xf32>
    %cst_15 = arith.constant dense<0.000000e+00> : vector<8x128xf32>
    %22 = vector.multi_reduction <add>, %21, %cst_15 [0] : vector<2x8x128xf32> to vector<8x128xf32>
    %23 = arith.addf %19, %22 : vector<8x128xf32>
    %c0_16 = arith.constant 0 : index
    %c0_17 = arith.constant 0 : index
    %24 = vector.load %arg11[%c0_16, %c0_17] : memref<8x128xf32, #tpu.memory_space<vmem>>, vector<8x128xf32>
    tpu.vector_store %arg11[%c0_16, %c0_17], %23 {strides = array<i32>} : memref<8x128xf32, #tpu.memory_space<vmem>>, vector<8x128xf32>,
    %c1_i32 = arith.constant 1 : i32
    %25 = arith.cmpi eq, %arg1, %c1_i32 : i32
    %26 = arith.extui %25 : i1 to i32
    %c0_i32_18 = arith.constant 0 : i32
    %27 = arith.cmpi ne, %26, %c0_i32_18 : i32
    scf.if %27 {
      %c0_19 = arith.constant 0 : index
      %c0_20 = arith.constant 0 : index
      %28 = vector.load %arg10[%c0_19, %c0_20] : memref<8x128xf32, #tpu.memory_space<vmem>>, vector<8x128xf32>
      %29 = vector.shape_cast %28 : vector<8x128xf32> to vector<1x8x128xf32>
      %cst_21 = arith.constant dense<0.000000e+00> : vector<1xf32>
      %30 = vector.multi_reduction <add>, %29, %cst_21 [1, 2] : vector<1x8x128xf32> to vector<1xf32>
      %31 = vector.shape_cast %30 : vector<1xf32> to vector<1x1x1xf32>
      %32 = vector.extract %31[0, 0, 0] : f32 from vector<1x1x1xf32>
      %33 = vector.broadcast %32 : f32 to vector<1x1x1xf32>
      %c0_22 = arith.constant 0 : index
      %c0_23 = arith.constant 0 : index
      %c0_24 = arith.constant 0 : index
      %34 = vector.load %arg7[%c0_22, %c0_23, %c0_24] : memref<1x1x1xf32, #tpu.memory_space<vmem>>, vector<1x1x1xf32>
      tpu.vector_store %arg7[%c0_22, %c0_23, %c0_24], %33 {strides = array<i32>} : memref<1x1x1xf32, #tpu.memory_space<vmem>>, vector<1x1x1xf32>,
      %c0_25 = arith.constant 0 : index
      %c0_26 = arith.constant 0 : index
      %35 = vector.load %arg11[%c0_25, %c0_26] : memref<8x128xf32, #tpu.memory_space<vmem>>, vector<8x128xf32>
      %36 = vector.shape_cast %35 : vector<8x128xf32> to vector<1x8x128xf32>
      %cst_27 = arith.constant dense<0.000000e+00> : vector<1xf32>
      %37 = vector.multi_reduction <add>, %36, %cst_27 [1, 2] : vector<1x8x128xf32> to vector<1xf32>
      %38 = vector.shape_cast %37 : vector<1xf32> to vector<1x1x1xf32>
      %39 = vector.extract %38[0, 0, 0] : f32 from vector<1x1x1xf32>
      %40 = vector.broadcast %39 : f32 to vector<1x1x1xf32>
      %c0_28 = arith.constant 0 : index
      %c0_29 = arith.constant 0 : index
      %c0_30 = arith.constant 0 : index
      %41 = vector.load %arg8[%c0_28, %c0_29, %c0_30] : memref<1x1x1xf32, #tpu.memory_space<vmem>>, vector<1x1x1xf32>
      tpu.vector_store %arg8[%c0_28, %c0_29, %c0_30], %40 {strides = array<i32>} : memref<1x1x1xf32, #tpu.memory_space<vmem>>, vector<1x1x1xf32>,
      %c0_31 = arith.constant 0 : index
      %c0_32 = arith.constant 0 : index
      %42 = vector.load %arg4[%c0_31, %c0_32] : memref<2x8xf32, #tpu.memory_space<vmem>>, vector<2x8xf32>
      %c0_33 = arith.constant 0 : index
      %c0_34 = arith.constant 0 : index
      %43 = vector.load %arg5[%c0_33, %c0_34] : memref<2x8xf32, #tpu.memory_space<vmem>>, vector<2x8xf32>
      %44 = arith.subf %42, %43 : vector<2x8xf32>
      %45 = arith.mulf %44, %44 : vector<2x8xf32>
      %46 = vector.shape_cast %45 : vector<2x8xf32> to vector<1x2x8xf32>
      %cst_35 = arith.constant dense<0.000000e+00> : vector<1xf32>
      %47 = vector.multi_reduction <add>, %46, %cst_35 [1, 2] : vector<1x2x8xf32> to vector<1xf32>
      %48 = vector.shape_cast %47 : vector<1xf32> to vector<1x1x1xf32>
      %49 = vector.extract %48[0, 0, 0] : f32 from vector<1x1x1xf32>
      %c0_i32_36 = arith.constant 0 : i32
      %50 = arith.cmpi eq, %arg0, %c0_i32_36 : i32
      %cst_37 = arith.constant 0.000000e+00 : f32
      %51 = arith.select %50, %49, %cst_37 : f32
      %52 = vector.broadcast %51 : f32 to vector<1x1x1xf32>
      %c0_38 = arith.constant 0 : index
      %c0_39 = arith.constant 0 : index
      %c0_40 = arith.constant 0 : index
      %53 = vector.load %arg9[%c0_38, %c0_39, %c0_40] : memref<1x1x1xf32, #tpu.memory_space<vmem>>, vector<1x1x1xf32>
      tpu.vector_store %arg9[%c0_38, %c0_39, %c0_40], %52 {strides = array<i32>} : memref<1x1x1xf32, #tpu.memory_space<vmem>>, vector<1x1x1xf32>,
    } else {
    }
    return
  }
  func.func @transform_0(%arg0: i32, %arg1: i32) -> (i32, i32) {
    %c2_i32 = arith.constant 2 : i32
    %0 = arith.muli %arg0, %c2_i32 : i32
    %1 = arith.addi %0, %arg1 : i32
    %c0_i32 = arith.constant 0 : i32
    %c0_i32_0 = arith.constant 0 : i32
    return %c0_i32, %1 : i32, i32
  }
  func.func @transform_1(%arg0: i32, %arg1: i32) -> (i32, i32) {
    %c2_i32 = arith.constant 2 : i32
    %0 = arith.muli %arg0, %c2_i32 : i32
    %1 = arith.addi %0, %arg1 : i32
    %c0_i32 = arith.constant 0 : i32
    %c0_i32_0 = arith.constant 0 : i32
    return %c0_i32, %1 : i32, i32
  }
  func.func @transform_2(%arg0: i32, %arg1: i32) -> (i32, i32) {
    %c0_i32 = arith.constant 0 : i32
    %c0_i32_0 = arith.constant 0 : i32
    %c0_i32_1 = arith.constant 0 : i32
    return %c0_i32, %c0_i32_0 : i32, i32
  }
  func.func @transform_3(%arg0: i32, %arg1: i32) -> (i32, i32) {
    %c0_i32 = arith.constant 0 : i32
    %c0_i32_0 = arith.constant 0 : i32
    %c0_i32_1 = arith.constant 0 : i32
    return %c0_i32, %c0_i32_0 : i32, i32
  }
  func.func @transform_4(%arg0: i32, %arg1: i32) -> (i32, i32) {
    %c0_i32 = arith.constant 0 : i32
    %c0_i32_0 = arith.constant 0 : i32
    %c0_i32_1 = arith.constant 0 : i32
    return %c0_i32, %c0_i32_0 : i32, i32
  }
  func.func @transform_5(%arg0: i32, %arg1: i32) -> (i32, i32, i32) {
    %c0_i32 = arith.constant 0 : i32
    %c0_i32_0 = arith.constant 0 : i32
    %c0_i32_1 = arith.constant 0 : i32
    return %arg0, %c0_i32, %c0_i32_0 : i32, i32, i32
  }
  func.func @transform_6(%arg0: i32, %arg1: i32) -> (i32, i32, i32) {
    %c0_i32 = arith.constant 0 : i32
    %c0_i32_0 = arith.constant 0 : i32
    %c0_i32_1 = arith.constant 0 : i32
    return %arg0, %c0_i32, %c0_i32_0 : i32, i32, i32
  }
  func.func @transform_7(%arg0: i32, %arg1: i32) -> (i32, i32, i32) {
    %c0_i32 = arith.constant 0 : i32
    %c0_i32_0 = arith.constant 0 : i32
    %c0_i32_1 = arith.constant 0 : i32
    return %arg0, %c0_i32, %c0_i32_0 : i32, i32, i32
  }
}

</mosaic_0001>

<llo_original>
// kernel: tpu_custom_call.1
$region0: #{tpu_custom_call.1}
  #allocation0 [shape = 'u32[]', space=smem, size = 0x4, offset = 0x4, fixed_abs, tag = 'smem constant byte address 0x4 - core index']
  #allocation1 [shape = 'u32[144,128]{1,0:T(1,128)}', space=vmem, size = 0x12000, scoped, tag = 'internal scratch']
  #allocation2 [shape = 'f32[8,128]{1,0:T(8,128)}', space=vmem, size = 0x1000, scoped, tag = 'scratch operand']
  #allocation3 [shape = 'f32[8,128]{1,0:T(8,128)}', space=vmem, size = 0x1000, scoped, tag = 'scratch operand']
  %s0 = inlined_call_operand.hbm [shape: f32[128,512], index: 0, kind: input, shape index: {}]
  %s1 = inlined_call_operand.hbm [shape: f32[128,512], index: 1, kind: input, shape index: {}]
  %s2 = inlined_call_operand.vmem [shape: f32[2,8], index: 2, kind: input, shape index: {}]
  %s3 = inlined_call_operand.vmem [shape: f32[2,8], index: 3, kind: input, shape index: {}]
  %s4 = inlined_call_operand.hbm [shape: f32[16,64], index: 4, kind: input, shape index: {}]
  %s5 = inlined_call_operand.vmem [shape: f32[2,1,1], index: 5, kind: output, shape index: {0}]
  %s6 = inlined_call_operand.vmem [shape: f32[2,1,1], index: 6, kind: output, shape index: {1}]
  %s7 = inlined_call_operand.vmem [shape: f32[2,1,1], index: 7, kind: output, shape index: {2}]
  %8 = xla_tuple %s5, %s6, %s7
  %s9 = sld [smem:[#allocation0]]
  $region89: #{tpu_custom_call.1} parent=0
    _
  %s11 = ssub.s32 1, %s9
  %s12 = scalar_select 0, %s11, %s9
  $region1: #{tpu_custom_call.1} parent=0
    #allocation4 [shape = 'u8[131072]{0}', space=vmem, size = 0x20000, scoped, tag = 'input window, operand 0']
    #allocation5 [shape = 's32[2]{0}', space=sflag, size = 0x8, scoped, tag = 'scoped memory for tpu_custom_call.1']
    #allocation6 [shape = 'u8[131072]{0}', space=vmem, size = 0x20000, scoped, tag = 'input window, operand 1']
    #allocation7 [shape = 's32[2]{0}', space=sflag, size = 0x8, scoped, tag = 'scoped memory for tpu_custom_call.1']
    #allocation8 [shape = 'u8[8192]{0}', space=vmem, size = 0x2000, scoped, tag = 'input window, operand 4, single buffered']
    %13 = vsyncpa [#allocation5], 0
    %s14 = scalar_lea.sflag [#allocation5], 1
    %15 = vsyncpa %s14, 0
    %16 = vsyncpa [#allocation7], 0
    %s17 = scalar_lea.sflag [#allocation7], 1
    %18 = vsyncpa %s17, 0
    loop: start=0, step=1, limit=6
    $region2: #{tpu_custom_call.1} parent=1 // loop_pre_header
      _
    $region3: #{tpu_custom_call.1} parent=1 // loop_header
      %s20 = sphi 0, %s24
      %p21 = scmp.ge.s32.totalorder %s20, 6
      %s27 = sphi 0, %s39
      %s28 = sphi 0, %s35
      %s29 = sphi 0, %s27
      %s30 = sphi 0, %s28
      %s31 = sphi 0, %s29
      %s32 = sphi 0, %s30
      %s46 = sphi 0, %s48
      %s49 = sphi 0, %s46
      %s50 = sphi 0, %s49
      %s66 = sphi 0, %s50
      %s76 = sphi 0, %s78
      %s79 = sphi 0, %s76
      %s80 = sphi 0, %s79
      %s96 = sphi 0, %s80
      %s100 = sphi 0, %s100
      %s102 = sphi 0, %s100
      %s103 = sphi 0, %s102
      %s117 = sphi 0, %s103
      %s121 = sphi 0, %s121
      %s123 = sphi 0, %s121
      %s124 = sphi 0, %s123
      %s138 = sphi 0, %s124
      %s142 = sphi 0, %s142
      %s144 = sphi 0, %s142
      %s145 = sphi 0, %s144
      %s159 = sphi 0, %s145
      %s165 = sphi 0, %s167
      %s168 = sphi 0, %s165
      %s169 = sphi 0, %s168
      %s185 = sphi 0, %s169
      %s191 = sphi 0, %s193
      %s194 = sphi 0, %s191
      %s195 = sphi 0, %s194
      %s211 = sphi 0, %s195
      %s217 = sphi 0, %s219
      %s220 = sphi 0, %s217
      %s221 = sphi 0, %s220
      %s237 = sphi 0, %s221
    $region4: #{tpu_custom_call.1} parent=1 // loop_header_branch
      %23 = sbr.rel (%p21) target = $region8
    $region5: #{tpu_custom_call.1} parent=1 // loop_body
      %s25 = ssub.s32 %s20, 1
      %s26 = ssub.s32 %s20, 2
      %s33 = sadd.s32 1, %s28
      %p34 = scmp.ge.s32.totalorder %s33, 2
      %s35 = scalar_select %p34, 0, %s33
      %s36 = sadd.s32 1, %s27
      %s37 = scalar_select %p34, %s36, %s27
      %p38 = scmp.ge.s32.totalorder %s37, 2
      %s39 = scalar_select %p38, 0, %s37
      %s40 = smul.u32 %s27, 2
      %s41 = sadd.s32 %s40, %s28
      %s42 = smul.u32 %s39, 2
      %s43 = sadd.s32 %s42, %s35
      %s44 = ssub.s32 %s41, %s43
      %p45 = scmp.eq.s32.totalorder %s44, 0
      %s47 = sadd.s32 %s46, 1
      %s48 = scalar_select %p45, %s46, %s47
      %p51 = pneg %p45
      %p52 = scmp.eq.s32.totalorder %s20, 3
      %p53 = por %p51, %p52
      %p54 = scmp.ne.s32.totalorder %s46, %s49
      %p55 = scmp.eq.s32.totalorder %s20, 0
      %p56 = por %p54, %p55
      %p57 = scmp.ne.s32.totalorder %s46, %s49
      %p58 = scmp.eq.s32.totalorder %s25, 3
      %p59 = por %p57, %p58
      %p60 = scmp.ne.s32.totalorder %s49, %s50
      %p61 = scmp.eq.s32.totalorder %s25, 0
      %p62 = por %p60, %p61
      %p63 = scmp.ne.s32.totalorder %s49, %s50
      %p64 = scmp.eq.s32.totalorder %s26, 3
      %p65 = por %p63, %p64
      %p67 = scmp.ne.s32.totalorder %s50, %s66
      %p68 = scmp.eq.s32.totalorder %s26, 0
      %p69 = por %p67, %p68
      %s70 = smul.u32 %s27, 2
      %s71 = sadd.s32 %s70, %s28
      %s72 = smul.u32 %s39, 2
      %s73 = sadd.s32 %s72, %s35
      %s74 = ssub.s32 %s71, %s73
      %p75 = scmp.eq.s32.totalorder %s74, 0
      %s77 = sadd.s32 %s76, 1
      %s78 = scalar_select %p75, %s76, %s77
      %p81 = pneg %p75
      %p82 = scmp.eq.s32.totalorder %s20, 3
      %p83 = por %p81, %p82
      %p84 = scmp.ne.s32.totalorder %s76, %s79
      %p85 = scmp.eq.s32.totalorder %s20, 0
      %p86 = por %p84, %p85
      %p87 = scmp.ne.s32.totalorder %s76, %s79
      %p88 = scmp.eq.s32.totalorder %s25, 3
      %p89 = por %p87, %p88
      %p90 = scmp.ne.s32.totalorder %s79, %s80
      %p91 = scmp.eq.s32.totalorder %s25, 0
      %p92 = por %p90, %p91
      %p93 = scmp.ne.s32.totalorder %s79, %s80
      %p94 = scmp.eq.s32.totalorder %s26, 3
      %p95 = por %p93, %p94
      %p97 = scmp.ne.s32.totalorder %s80, %s96
      %p98 = scmp.eq.s32.totalorder %s26, 0
      %p99 = por %p97, %p98
      %s101 = sadd.s32 %s100, 1
      %p104 = scmp.eq.s32.totalorder %s20, 3
      %p105 = scmp.ne.s32.totalorder %s100, %s102
      %p106 = scmp.eq.s32.totalorder %s20, 0
      %p107 = por %p105, %p106
      %p108 = scmp.ne.s32.totalorder %s100, %s102
      %p109 = scmp.eq.s32.totalorder %s25, 3
      %p110 = por %p108, %p109
      %p111 = scmp.ne.s32.totalorder %s102, %s103
      %p112 = scmp.eq.s32.totalorder %s25, 0
      %p113 = por %p111, %p112
      %p114 = scmp.ne.s32.totalorder %s102, %s103
      %p115 = scmp.eq.s32.totalorder %s26, 3
      %p116 = por %p114, %p115
      %p118 = scmp.ne.s32.totalorder %s103, %s117
      %p119 = scmp.eq.s32.totalorder %s26, 0
      %p120 = por %p118, %p119
      %s122 = sadd.s32 %s121, 1
      %p125 = scmp.eq.s32.totalorder %s20, 3
      %p126 = scmp.ne.s32.totalorder %s121, %s123
      %p127 = scmp.eq.s32.totalorder %s20, 0
      %p128 = por %p126, %p127
      %p129 = scmp.ne.s32.totalorder %s121, %s123
      %p130 = scmp.eq.s32.totalorder %s25, 3
      %p131 = por %p129, %p130
      %p132 = scmp.ne.s32.totalorder %s123, %s124
      %p133 = scmp.eq.s32.totalorder %s25, 0
      %p134 = por %p132, %p133
      %p135 = scmp.ne.s32.totalorder %s123, %s124
      %p136 = scmp.eq.s32.totalorder %s26, 3
      %p137 = por %p135, %p136
      %p139 = scmp.ne.s32.totalorder %s124, %s138
      %p140 = scmp.eq.s32.totalorder %s26, 0
      %p141 = por %p139, %p140
      %s143 = sadd.s32 %s142, 1
      %p146 = scmp.eq.s32.totalorder %s20, 3
      %p147 = scmp.ne.s32.totalorder %s142, %s144
      %p148 = scmp.eq.s32.totalorder %s20, 0
      %p149 = por %p147, %p148
      %p150 = scmp.ne.s32.totalorder %s142, %s144
      %p151 = scmp.eq.s32.totalorder %s25, 3
      %p152 = por %p150, %p151
      %p153 = scmp.ne.s32.totalorder %s144, %s145
      %p154 = scmp.eq.s32.totalorder %s25, 0
      %p155 = por %p153, %p154
      %p156 = scmp.ne.s32.totalorder %s144, %s145
      %p157 = scmp.eq.s32.totalorder %s26, 3
      %p158 = por %p156, %p157
      %p160 = scmp.ne.s32.totalorder %s145, %s159
      %p161 = scmp.eq.s32.totalorder %s26, 0
      %p162 = por %p160, %p161
      %s163 = ssub.s32 %s27, %s39
      %p164 = scmp.eq.s32.totalorder %s163, 0
      %s166 = sadd.s32 %s165, 1
      %s167 = scalar_select %p164, %s165, %s166
      %p170 = pneg %p164
      %p171 = scmp.eq.s32.totalorder %s20, 3
      %p172 = por %p170, %p171
      %p173 = scmp.ne.s32.totalorder %s165, %s168
      %p174 = scmp.eq.s32.totalorder %s20, 0
      %p175 = por %p173, %p174
      %p176 = scmp.ne.s32.totalorder %s165, %s168
      %p177 = scmp.eq.s32.totalorder %s25, 3
      %p178 = por %p176, %p177
      %p179 = scmp.ne.s32.totalorder %s168, %s169
      %p180 = scmp.eq.s32.totalorder %s25, 0
      %p181 = por %p179, %p180
      %p182 = scmp.ne.s32.totalorder %s168, %s169
      %p183 = scmp.eq.s32.totalorder %s26, 3
      %p184 = por %p182, %p183
      %p186 = scmp.ne.s32.totalorder %s169, %s185
      %p187 = scmp.eq.s32.totalorder %s26, 0
      %p188 = por %p186, %p187
      %s189 = ssub.s32 %s27, %s39
      %p190 = scmp.eq.s32.totalorder %s189, 0
      %s192 = sadd.s32 %s191, 1
      %s193 = scalar_select %p190, %s191, %s192
      %p196 = pneg %p190
      %p197 = scmp.eq.s32.totalorder %s20, 3
      %p198 = por %p196, %p197
      %p199 = scmp.ne.s32.totalorder %s191, %s194
      %p200 = scmp.eq.s32.totalorder %s20, 0
      %p201 = por %p199, %p200
      %p202 = scmp.ne.s32.totalorder %s191, %s194
      %p203 = scmp.eq.s32.totalorder %s25, 3
      %p204 = por %p202, %p203
      %p205 = scmp.ne.s32.totalorder %s194, %s195
      %p206 = scmp.eq.s32.totalorder %s25, 0
      %p207 = por %p205, %p206
      %p208 = scmp.ne.s32.totalorder %s194, %s195
      %p209 = scmp.eq.s32.totalorder %s26, 3
      %p210 = por %p208, %p209
      %p212 = scmp.ne.s32.totalorder %s195, %s211
      %p213 = scmp.eq.s32.totalorder %s26, 0
      %p214 = por %p212, %p213
      %s215 = ssub.s32 %s27, %s39
      %p216 = scmp.eq.s32.totalorder %s215, 0
      %s218 = sadd.s32 %s217, 1
      %s219 = scalar_select %p216, %s217, %s218
      %p222 = pneg %p216
      %p223 = scmp.eq.s32.totalorder %s20, 3
      %p224 = por %p222, %p223
      %p225 = scmp.ne.s32.totalorder %s217, %s220
      %p226 = scmp.eq.s32.totalorder %s20, 0
      %p227 = por %p225, %p226
      %p228 = scmp.ne.s32.totalorder %s217, %s220
      %p229 = scmp.eq.s32.totalorder %s25, 3
      %p230 = por %p228, %p229
      %p231 = scmp.ne.s32.totalorder %s220, %s221
      %p232 = scmp.eq.s32.totalorder %s25, 0
      %p233 = por %p231, %p232
      %p234 = scmp.ne.s32.totalorder %s220, %s221
      %p235 = scmp.eq.s32.totalorder %s26, 3
      %p236 = por %p234, %p235
      %p238 = scmp.ne.s32.totalorder %s221, %s237
      %p239 = scmp.eq.s32.totalorder %s26, 0
      %p240 = por %p238, %p239
      %p241 = scmp.le.s32.totalorder 1, %s20
      %p242 = scmp.lt.s32.totalorder %s20, 5
      %p243 = pnand %p241, %p242
      %p244 = pneg %p243
      // Predicated region
      $region9: #{tpu_custom_call.1} parent=5 // pred_check
        _
      $region10: #{tpu_custom_call.1} parent=5 // pred_check_branch
        %246 = sbr.rel (%p243) target = $region12
      $region11: #{tpu_custom_call.1} parent=5 // pred_region
        %s247 = ssub.s32 %s20, 1
        // Predicated region
        $region13: #{tpu_custom_call.1} parent=11 // pred_check
          %p248 = pneg %p113
        $region14: #{tpu_custom_call.1} parent=11 // pred_check_branch
          %250 = sbr.rel (%p248) target = $region16
        $region15: #{tpu_custom_call.1} parent=11 // pred_region
          _
        $region16: #{tpu_custom_call.1} parent=11 // pred_fallthru
          _
        // Predicated region
        $region17: #{tpu_custom_call.1} parent=11 // pred_check
          %p251 = pneg %p134
        $region18: #{tpu_custom_call.1} parent=11 // pred_check_branch
          %253 = sbr.rel (%p251) target = $region20
        $region19: #{tpu_custom_call.1} parent=11 // pred_region
          _
        $region20: #{tpu_custom_call.1} parent=11 // pred_fallthru
          _
        // Predicated region
        $region21: #{tpu_custom_call.1} parent=11 // pred_check
          %p254 = pneg %p155
        $region22: #{tpu_custom_call.1} parent=11 // pred_check_branch
          %256 = sbr.rel (%p254) target = $region24
        $region23: #{tpu_custom_call.1} parent=11 // pred_region
          %s258 = ssub.s32 256, 256
          %259 = vsyncadd [#allocation7], %s258
          %s260 = sshll.u32 [#allocation8], 4
          %s261 = int_to_ptr.vmem [resolvable:$true] %s260
          %266 = dma.hbm_to_vmem [thread:$0]  %s4, 256, %s261, [#allocation7], 128, 128, 8
        $region24: #{tpu_custom_call.1} parent=11 // pred_fallthru
          _
      $region12: #{tpu_custom_call.1} parent=5 // pred_fallthru
        _
      %p267 = scmp.lt.s32.totalorder %s20, 4
      // Predicated region
      $region25: #{tpu_custom_call.1} parent=5 // pred_check
        %p268 = pneg %p267
      $region26: #{tpu_custom_call.1} parent=5 // pred_check_branch
        %270 = sbr.rel (%p268) target = $region28
      $region27: #{tpu_custom_call.1} parent=5 // pred_region
        // Predicated region
        $region29: #{tpu_custom_call.1} parent=27 // pred_check
          %p271 = pneg %p56
        $region30: #{tpu_custom_call.1} parent=27 // pred_check_branch
          %273 = sbr.rel (%p271) target = $region32
        $region31: #{tpu_custom_call.1} parent=27 // pred_region
          %s274 = sand.u32 %s46, 1
          %s275 = scalar_lea.sflag [#allocation5], %s274
          %s276 = sand.u32 %s46, 1
          %s277 = smul.addr %s276, 128
          %s278 = scalar_lea.vmem [#allocation4], %s277
          %s279 = smul.u32 %s27, 2
          %s280 = sadd.s32 %s279, %s28
          %s282 = ssub.s32 2048, 2048
          %283 = vsyncadd %s275, %s282
          %s284 = smul.addr %s280, 128
          %s285 = scalar_lea.hbm %s0, %s284
          %s286 = sshll.u32 %s278, 4
          %s287 = int_to_ptr.vmem [resolvable:$true] %s286
          %292 = dma.hbm_to_vmem [thread:$0]  %s285, 2048, %s287, %s275, 512, 128, 8
        $region32: #{tpu_custom_call.1} parent=27 // pred_fallthru
          _
        // Predicated region
        $region33: #{tpu_custom_call.1} parent=27 // pred_check
          %p293 = pneg %p86
        $region34: #{tpu_custom_call.1} parent=27 // pred_check_branch
          %295 = sbr.rel (%p293) target = $region36
        $region35: #{tpu_custom_call.1} parent=27 // pred_region
          %s296 = sand.u32 %s20, 1
          %s297 = scalar_lea.sflag [#allocation7], %s296
          %s298 = sand.u32 %s76, 1
          %s299 = smul.addr %s298, 128
          %s300 = scalar_lea.vmem [#allocation6], %s299
          %s301 = smul.u32 %s27, 2
          %s302 = sadd.s32 %s301, %s28
          %s304 = ssub.s32 2048, 2048
          %305 = vsyncadd %s297, %s304
          %s306 = smul.addr %s302, 128
          %s307 = scalar_lea.hbm %s1, %s306
          %s308 = sshll.u32 %s300, 4
          %s309 = int_to_ptr.vmem [resolvable:$true] %s308
          %314 = dma.hbm_to_vmem [thread:$0]  %s307, 2048, %s309, %s297, 512, 128, 8
        $region36: #{tpu_custom_call.1} parent=27 // pred_fallthru
          _
      $region28: #{tpu_custom_call.1} parent=5 // pred_fallthru
        _
      %p315 = scmp.le.s32.totalorder 1, %s20
      %p316 = scmp.lt.s32.totalorder %s20, 5
      %p317 = pnand %p315, %p316
      %p318 = pneg %p317
      // Predicated region
      $region37: #{tpu_custom_call.1} parent=5 // pred_check
        _
      $region38: #{tpu_custom_call.1} parent=5 // pred_check_branch
        %320 = sbr.rel (%p317) target = $region40
      $region39: #{tpu_custom_call.1} parent=5 // pred_region
        %s321 = ssub.s32 %s20, 1
        %s322 = sand.u32 %s49, 1
        %s323 = scalar_lea.sflag [#allocation5], %s322
        %s324 = sand.u32 %s49, 1
        %s325 = smul.addr %s324, 128
        %s326 = scalar_lea.vmem [#allocation4], %s325
        // Predicated region
        $region41: #{tpu_custom_call.1} parent=39 // pred_check
          %p327 = pneg %p62
        $region42: #{tpu_custom_call.1} parent=39 // pred_check_branch
          %329 = sbr.rel (%p327) target = $region44
        $region43: #{tpu_custom_call.1} parent=39 // pred_region
          %330 = dma.done %s323, 2048
        $region44: #{tpu_custom_call.1} parent=39 // pred_fallthru
          _
        %s331 = sand.u32 %s25, 1
        %s332 = scalar_lea.sflag [#allocation7], %s331
        %s333 = sand.u32 %s79, 1
        %s334 = smul.addr %s333, 128
        %s335 = scalar_lea.vmem [#allocation6], %s334
        // Predicated region
        $region45: #{tpu_custom_call.1} parent=39 // pred_check
          %p336 = pneg %p92
        $region46: #{tpu_custom_call.1} parent=39 // pred_check_branch
          %338 = sbr.rel (%p336) target = $region48
        $region47: #{tpu_custom_call.1} parent=39 // pred_region
          %339 = dma.done %s332, 2048
        $region48: #{tpu_custom_call.1} parent=39 // pred_fallthru
          _
        // Predicated region
        $region49: #{tpu_custom_call.1} parent=39 // pred_check
          %p340 = pneg %p155
        $region50: #{tpu_custom_call.1} parent=39 // pred_check_branch
          %342 = sbr.rel (%p340) target = $region52
        $region51: #{tpu_custom_call.1} parent=39 // pred_region
          %343 = dma.done [#allocation7], 256
        $region52: #{tpu_custom_call.1} parent=39 // pred_fallthru
          _
        %s344 = sand.u32 %s49, 1
        %s345 = scalar_lea.sflag [#allocation5], %s344
        %s346 = sand.u32 %s49, 1
        %s347 = smul.addr %s346, 128
        %s348 = scalar_lea.vmem [#allocation4], %s347
        %p349 = pneg %p62
        %p350 = pneg %p59
        %s351 = sand.u32 %s25, 1
        %s352 = scalar_lea.sflag [#allocation7], %s351
        %s353 = sand.u32 %s79, 1
        %s354 = smul.addr %s353, 128
        %s355 = scalar_lea.vmem [#allocation6], %s354
        %p356 = pneg %p92
        %p357 = pneg %p89
        %p358 = pneg %p113
        %p359 = pneg %p110
        %p360 = pneg %p134
        %p361 = pneg %p131
        %p362 = pneg %p155
        %p363 = pneg %p152
        %p364 = pneg %p181
        %p365 = pneg %p178
        %p366 = scmp.lt.s32.totalorder %s29, 1
        %s367 = scalar_select %p366, %s29, 1
        %s368 = scalar_lea.vmem %s5, %s367
        %p369 = pneg %p207
        %p370 = pneg %p204
        %p371 = scmp.lt.s32.totalorder %s29, 1
        %s372 = scalar_select %p371, %s29, 1
        %s373 = scalar_lea.vmem %s6, %s372
        %p374 = pneg %p233
        %p375 = pneg %p230
        %p376 = scmp.lt.s32.totalorder %s29, 1
        %s377 = scalar_select %p376, %s29, 1
        %s378 = scalar_lea.vmem %s7, %s377
        %s379 = smul.u32 %s29, 2
        %s380 = sadd.s32 %s379, %s30
        %s381 = smul.u32 %s29, 2
        %s382 = sadd.s32 %s381, %s30
        %p383 = scmp.lt.s32.totalorder %s29, 1
        %s384 = scalar_select %p383, %s29, 1
        %s385 = scalar_lea.vmem %s5, %s384
        %p386 = scmp.lt.s32.totalorder %s29, 1
        %s387 = scalar_select %p386, %s29, 1
        %s388 = scalar_lea.vmem %s6, %s387
        %p389 = scmp.lt.s32.totalorder %s29, 1
        %s390 = scalar_select %p389, %s29, 1
        %s391 = scalar_lea.vmem %s7, %s390
        %p392 = scmp.eq.s32.totalorder %s30, 0
        // Predicated region
        $region53: #{tpu_custom_call.1} parent=39 // pred_check
          %p393 = pneg %p392
        $region54: #{tpu_custom_call.1} parent=39 // pred_check_branch
          %395 = sbr.rel (%p393) target = $region56
        $region55: #{tpu_custom_call.1} parent=39 // pred_region
          %396 = vst [vmem:[#allocation2] sm:$0xff] 0.0
          %397 = vst [vmem:[#allocation3] sm:$0xff] 0.0
        $region56: #{tpu_custom_call.1} parent=39 // pred_fallthru
          _
        %v398 = vld [vmem:[%s326] sm:$0xff]
        %v399 = vld [vmem:[%s326 + $0x8] sm:$0xff]
        %v400 = vld [vmem:[%s326 + $0x10] sm:$0xff]
        %v401 = vld [vmem:[%s326 + $0x18] sm:$0xff]
        %v402 = vld [vmem:[%s326 + $0x20] sm:$0xff]
        %v403 = vld [vmem:[%s326 + $0x28] sm:$0xff]
        %v404 = vld [vmem:[%s326 + $0x30] sm:$0xff]
        %v405 = vld [vmem:[%s326 + $0x38] sm:$0xff]
        %v406 = vld [vmem:[%s326 + $0x40] sm:$0xff]
        %v407 = vld [vmem:[%s326 + $0x48] sm:$0xff]
        %v408 = vld [vmem:[%s326 + $0x50] sm:$0xff]
        %v409 = vld [vmem:[%s326 + $0x58] sm:$0xff]
        %v410 = vld [vmem:[%s326 + $0x60] sm:$0xff]
        %v411 = vld [vmem:[%s326 + $0x68] sm:$0xff]
        %v412 = vld [vmem:[%s326 + $0x70] sm:$0xff]
        %v413 = vld [vmem:[%s326 + $0x78] sm:$0xff]
        %v414 = vmax.f32 %v398, 1e-06
        %v415 = vmax.f32 %v399, 1e-06
        %v416 = vmax.f32 %v400, 1e-06
        %v417 = vmax.f32 %v401, 1e-06
        %v418 = vmax.f32 %v402, 1e-06
        %v419 = vmax.f32 %v403, 1e-06
        %v420 = vmax.f32 %v404, 1e-06
        %v421 = vmax.f32 %v405, 1e-06
        %v422 = vmax.f32 %v406, 1e-06
        %v423 = vmax.f32 %v407, 1e-06
        %v424 = vmax.f32 %v408, 1e-06
        %v425 = vmax.f32 %v409, 1e-06
        %v426 = vmax.f32 %v410, 1e-06
        %v427 = vmax.f32 %v411, 1e-06
        %v428 = vmax.f32 %v412, 1e-06
        %v429 = vmax.f32 %v413, 1e-06
        %v430 = vld [vmem:[%s335] sm:$0xff]
        %v431 = vld [vmem:[%s335 + $0x8] sm:$0xff]
        %v432 = vld [vmem:[%s335 + $0x10] sm:$0xff]
        %v433 = vld [vmem:[%s335 + $0x18] sm:$0xff]
        %v434 = vld [vmem:[%s335 + $0x20] sm:$0xff]
        %v435 = vld [vmem:[%s335 + $0x28] sm:$0xff]
        %v436 = vld [vmem:[%s335 + $0x30] sm:$0xff]
        %v437 = vld [vmem:[%s335 + $0x38] sm:$0xff]
        %v438 = vld [vmem:[%s335 + $0x40] sm:$0xff]
        %v439 = vld [vmem:[%s335 + $0x48] sm:$0xff]
        %v440 = vld [vmem:[%s335 + $0x50] sm:$0xff]
        %v441 = vld [vmem:[%s335 + $0x58] sm:$0xff]
        %v442 = vld [vmem:[%s335 + $0x60] sm:$0xff]
        %v443 = vld [vmem:[%s335 + $0x68] sm:$0xff]
        %v444 = vld [vmem:[%s335 + $0x70] sm:$0xff]
        %v445 = vld [vmem:[%s335 + $0x78] sm:$0xff]
        %v446 = vmax.f32 %v430, 1e-06
        %v447 = vmax.f32 %v431, 1e-06
        %v448 = vmax.f32 %v432, 1e-06
        %v449 = vmax.f32 %v433, 1e-06
        %v450 = vmax.f32 %v434, 1e-06
        %v451 = vmax.f32 %v435, 1e-06
        %v452 = vmax.f32 %v436, 1e-06
        %v453 = vmax.f32 %v437, 1e-06
        %v454 = vmax.f32 %v438, 1e-06
        %v455 = vmax.f32 %v439, 1e-06
        %v456 = vmax.f32 %v440, 1e-06
        %v457 = vmax.f32 %v441, 1e-06
        %v458 = vmax.f32 %v442, 1e-06
        %v459 = vmax.f32 %v443, 1e-06
        %v460 = vmax.f32 %v444, 1e-06
        %v461 = vmax.f32 %v445, 1e-06
        %v462 = vsub.f32 %v414, %v446
        %v463 = vsub.f32 %v415, %v447
        %v464 = vsub.f32 %v416, %v448
        %v465 = vsub.f32 %v417, %v449
        %v466 = vsub.f32 %v418, %v450
        %v467 = vsub.f32 %v419, %v451
        %v468 = vsub.f32 %v420, %v452
        %v469 = vsub.f32 %v421, %v453
        %v470 = vsub.f32 %v422, %v454
        %v471 = vsub.f32 %v423, %v455
        %v472 = vsub.f32 %v424, %v456
        %v473 = vsub.f32 %v425, %v457
        %v474 = vsub.f32 %v426, %v458
        %v475 = vsub.f32 %v427, %v459
        %v476 = vsub.f32 %v428, %v460
        %v477 = vsub.f32 %v429, %v461
        %v478 = vand.u32 2147483647, %v462
        %v479 = vand.u32 2147483647, %v463
        %v480 = vand.u32 2147483647, %v464
        %v481 = vand.u32 2147483647, %v465
        %v482 = vand.u32 2147483647, %v466
        %v483 = vand.u32 2147483647, %v467
        %v484 = vand.u32 2147483647, %v468
        %v485 = vand.u32 2147483647, %v469
        %v486 = vand.u32 2147483647, %v470
        %v487 = vand.u32 2147483647, %v471
        %v488 = vand.u32 2147483647, %v472
        %v489 = vand.u32 2147483647, %v473
        %v490 = vand.u32 2147483647, %v474
        %v491 = vand.u32 2147483647, %v475
        %v492 = vand.u32 2147483647, %v476
        %v493 = vand.u32 2147483647, %v477
        %v494 = vld [vmem:[#allocation2] sm:$0xff]
        %v495 = vadd.f32 %v478, %v479
        %v496 = vadd.f32 %v495, %v480
        %v497 = vadd.f32 %v496, %v481
        %v498 = vadd.f32 %v497, %v482
        %v499 = vadd.f32 %v498, %v483
        %v500 = vadd.f32 %v499, %v484
        %v501 = vadd.f32 %v500, %v485
        %v502 = vadd.f32 %v501, %v486
        %v503 = vadd.f32 %v502, %v487
        %v504 = vadd.f32 %v503, %v488
        %v505 = vadd.f32 %v504, %v489
        %v506 = vadd.f32 %v505, %v490
        %v507 = vadd.f32 %v506, %v491
        %v508 = vadd.f32 %v507, %v492
        %v509 = vadd.f32 %v508, %v493
        %v510 = vadd.f32 %v494, %v509
        %511 = vst [vmem:[#allocation2] sm:$0xff] %v510
        %v512 = vld [vmem:[#allocation8] sm:$0xff]
        %v513 = vld [vmem:[#allocation8 + $0x8] sm:$0xff]
        %vm514 = vcmask 523264
        %v516 = vsel %vm514, %v512, 0
        %v519 = vsel %vm514, %v513, 0
        %521 = vmatprep.subr.mxu0 0.0
        %522 = vmatpush1.msra.mxu0 %v462
        %523 = vmatprep.subr.mxu0 0.0
        %524 = vmatpush1.msra.mxu0 %v463
        %525 = vmatprep.subr.mxu0 0.0
        %526 = vmatpush1.msra.mxu0 %v464
        %527 = vmatprep.subr.mxu0 0.0
        %528 = vmatpush1.msra.mxu0 %v465
        %529 = vmatprep.subr.mxu0 0.0
        %530 = vmatpush1.msra.mxu0 %v466
        %531 = vmatprep.subr.mxu0 0.0
        %532 = vmatpush1.msra.mxu0 %v467
        %533 = vmatprep.subr.mxu0 0.0
        %534 = vmatpush1.msra.mxu0 %v468
        %535 = vmatprep.subr.mxu0 0.0
        %536 = vmatpush1.msra.mxu0 %v469
        %537 = vmatprep.subr.mxu0 0.0
        %538 = vmatpush1.msra.mxu0 0.0
        %539 = vmatprep.subr.mxu0 0.0
        %540 = vmatpush1.msra.mxu0 0.0
        %541 = vmatprep.subr.mxu0 0.0
        %542 = vmatpush1.msra.mxu0 0.0
        %543 = vmatprep.subr.mxu0 0.0
        %544 = vmatpush1.msra.mxu0 0.0
        %545 = vmatprep.subr.mxu0 0.0
        %546 = vmatpush1.msra.mxu0 0.0
        %547 = vmatprep.subr.mxu0 0.0
        %548 = vmatpush1.msra.mxu0 0.0
        %549 = vmatprep.subr.mxu0 0.0
        %550 = vmatpush1.msra.mxu0 0.0
        %551 = vmatprep.subr.mxu0 0.0
        %552 = vmatpush1.msra.mxu0 0.0
        %553 = vmatprep.subr.mxu0 0.0
        %554 = vmatpush1.msra.mxu0 0.0
        %555 = vmatprep.subr.mxu0 0.0
        %556 = vmatpush1.msra.mxu0 0.0
        %557 = vmatprep.subr.mxu0 0.0
        %558 = vmatpush1.msra.mxu0 0.0
        %559 = vmatprep.subr.mxu0 0.0
        %560 = vmatpush1.msra.mxu0 0.0
        %561 = vmatprep.subr.mxu0 0.0
        %562 = vmatpush1.msra.mxu0 0.0
        %563 = vmatprep.subr.mxu0 0.0
        %564 = vmatpush1.msra.mxu0 0.0
        %565 = vmatprep.subr.mxu0 0.0
        %566 = vmatpush1.msra.mxu0 0.0
        %567 = vmatprep.subr.mxu0 0.0
        %568 = vmatpush1.msra.mxu0 0.0
        %569 = vmatprep.subr.mxu0 0.0
        %570 = vmatpush1.msra.mxu0 0.0
        %571 = vmatprep.subr.mxu0 0.0
        %572 = vmatpush1.msra.mxu0 0.0
        %573 = vmatprep.subr.mxu0 0.0
        %574 = vmatpush1.msra.mxu0 0.0
        %575 = vmatprep.subr.mxu0 0.0
        %576 = vmatpush1.msra.mxu0 0.0
        %577 = vmatprep.subr.mxu0 0.0
        %578 = vmatpush1.msra.mxu0 0.0
        %579 = vmatprep.subr.mxu0 0.0
        %580 = vmatpush1.msra.mxu0 0.0
        %581 = vmatprep.subr.mxu0 0.0
        %582 = vmatpush1.msra.mxu0 0.0
        %583 = vmatprep.subr.mxu0 0.0
        %584 = vmatpush1.msra.mxu0 0.0
        %585 = vmatprep.mubr.f32.mxu0 0.0
        %586 = vmatmul.mubr.f32.gmra.mrb[0].mxu0 %v516
        %v587 = vpop.f32.mrb[0].mxu0
        %v588 = vadd.f32 0.0, %v587
        %v589 = vpop.f32.mrb[0].mxu0
        %590 = vmatprep.mubr.f32.mxu0 0.0
        %591 = vmatmul.mubr.f32.gmra.mrb[0].mxu0 %v519
        %v592 = vpop.f32.mrb[0].mxu0
        %v593 = vadd.f32 0.0, %v592
        %v594 = vpop.f32.mrb[0].mxu0
        %595 = vdwg.mxu0
        %v596 = vld [vmem:[#allocation3] sm:$0xff]
        %v597 = vand.u32 2147483647, %v588
        %v598 = vand.u32 2147483647, %v593
        %v599 = vadd.f32 %v597, %v598
        %v600 = vadd.f32 %v596, %v599
        %601 = vst [vmem:[#allocation3] sm:$0xff] %v600
        %p602 = scmp.eq.s32.totalorder %s30, 1
        // Predicated region
        $region57: #{tpu_custom_call.1} parent=39 // pred_check
          %p603 = pneg %p602
        $region58: #{tpu_custom_call.1} parent=39 // pred_check_branch
          %605 = sbr.rel (%p603) target = $region60
        $region59: #{tpu_custom_call.1} parent=39 // pred_region
          %v606 = vld [vmem:[#allocation2] sm:$0xff]
          %607 = vadd.xlane.f32.xlu0 %v606
          %v608 = vpop.xlane.xlu0 %607
          %v609 = vrot.slane %v608, 4
          %v610 = vadd.f32 %v608, %v609
          %v611 = vrot.slane %v610, 2
          %v612 = vadd.f32 %v610, %v611
          %v613 = vrot.slane %v612, 1
          %v614 = vadd.f32 %v612, %v613
          %s615 = vtos %v614
          %v616 = vstv %s615
          %vm617 = vcmask 0
          %618 = vst.msk [vmem:[%s385] sm:$0x1] %vm617, %v616
          %v619 = vld [vmem:[#allocation3] sm:$0xff]
          %620 = vadd.xlane.f32.xlu0 %v619
          %v621 = vpop.xlane.xlu0 %620
          %v622 = vrot.slane %v621, 4
          %v623 = vadd.f32 %v621, %v622
          %v624 = vrot.slane %v623, 2
          %v625 = vadd.f32 %v623, %v624
          %v626 = vrot.slane %v625, 1
          %v627 = vadd.f32 %v625, %v626
          %s628 = vtos %v627
          %v629 = vstv %s628
          %630 = vst.msk [vmem:[%s388] sm:$0x1] %vm617, %v629
          %v631 = vld [vmem:[%s2] sm:$0x3]
          %v632 = vld [vmem:[%s3] sm:$0x3]
          %v633 = vsub.f32 %v631, %v632
          %v634 = vmul.f32 %v633, %v633
          %vm635 = vcmask 58368
          %v636 = vsel %vm635, %v634, 0.0
          %637 = vadd.xlane.f32.xlu0 %v636
          %v638 = vpop.xlane.xlu0 %637
          %v639 = vrot.slane %v638, 4
          %v640 = vadd.f32 %v638, %v639
          %v641 = vrot.slane %v640, 2
          %v642 = vadd.f32 %v640, %v641
          %v643 = vrot.slane %v642, 1
          %v644 = vadd.f32 %v642, %v643
          %s645 = vtos %v644
          %p646 = scmp.eq.s32.totalorder %s29, 0
          %s647 = scalar_select %p646, %s645, 0.0
          %v648 = vstv %s647
          %649 = vst.msk [vmem:[%s391] sm:$0x1] %vm617, %v648
        $region60: #{tpu_custom_call.1} parent=39 // pred_fallthru
          _
        %p650 = scmp.lt.s32.totalorder %s29, 1
        %s651 = scalar_select %p650, %s29, 1
        %s652 = scalar_lea.vmem %s5, %s651
        %p653 = scmp.lt.s32.totalorder %s29, 1
        %s654 = scalar_select %p653, %s29, 1
        %s655 = scalar_lea.vmem %s6, %s654
        %p656 = scmp.lt.s32.totalorder %s29, 1
        %s657 = scalar_select %p656, %s29, 1
        %s658 = scalar_lea.vmem %s7, %s657
        // Predicated region
        $region61: #{tpu_custom_call.1} parent=39 // pred_check
          %p659 = pneg %p178
        $region62: #{tpu_custom_call.1} parent=39 // pred_check_branch
          %661 = sbr.rel (%p659) target = $region64
        $region63: #{tpu_custom_call.1} parent=39 // pred_region
          _
        $region64: #{tpu_custom_call.1} parent=39 // pred_fallthru
          _
        // Predicated region
        $region65: #{tpu_custom_call.1} parent=39 // pred_check
          %p662 = pneg %p204
        $region66: #{tpu_custom_call.1} parent=39 // pred_check_branch
          %664 = sbr.rel (%p662) target = $region68
        $region67: #{tpu_custom_call.1} parent=39 // pred_region
          _
        $region68: #{tpu_custom_call.1} parent=39 // pred_fallthru
          _
        // Predicated region
        $region69: #{tpu_custom_call.1} parent=39 // pred_check
          %p665 = pneg %p230
        $region70: #{tpu_custom_call.1} parent=39 // pred_check_branch
          %667 = sbr.rel (%p665) target = $region72
        $region71: #{tpu_custom_call.1} parent=39 // pred_region
          _
        $region72: #{tpu_custom_call.1} parent=39 // pred_fallthru
          _
      $region40: #{tpu_custom_call.1} parent=5 // pred_fallthru
        _
      %p668 = scmp.le.s32.totalorder 2, %s20
      // Predicated region
      $region73: #{tpu_custom_call.1} parent=5 // pred_check
        %p669 = pneg %p668
      $region74: #{tpu_custom_call.1} parent=5 // pred_check_branch
        %671 = sbr.rel (%p669) target = $region76
      $region75: #{tpu_custom_call.1} parent=5 // pred_region
        %s672 = ssub.s32 %s20, 2
        // Predicated region
        $region77: #{tpu_custom_call.1} parent=75 // pred_check
          %p673 = pneg %p184
        $region78: #{tpu_custom_call.1} parent=75 // pred_check_branch
          %675 = sbr.rel (%p673) target = $region80
        $region79: #{tpu_custom_call.1} parent=75 // pred_region
          %p676 = scmp.lt.s32.totalorder %s31, 1
          %s677 = scalar_select %p676, %s31, 1
          %s678 = scalar_lea.vmem %s5, %s677
        $region80: #{tpu_custom_call.1} parent=75 // pred_fallthru
          _
        // Predicated region
        $region81: #{tpu_custom_call.1} parent=75 // pred_check
          %p679 = pneg %p210
        $region82: #{tpu_custom_call.1} parent=75 // pred_check_branch
          %681 = sbr.rel (%p679) target = $region84
        $region83: #{tpu_custom_call.1} parent=75 // pred_region
          %p682 = scmp.lt.s32.totalorder %s31, 1
          %s683 = scalar_select %p682, %s31, 1
          %s684 = scalar_lea.vmem %s6, %s683
        $region84: #{tpu_custom_call.1} parent=75 // pred_fallthru
          _
        // Predicated region
        $region85: #{tpu_custom_call.1} parent=75 // pred_check
          %p685 = pneg %p236
        $region86: #{tpu_custom_call.1} parent=75 // pred_check_branch
          %687 = sbr.rel (%p685) target = $region88
        $region87: #{tpu_custom_call.1} parent=75 // pred_region
          %p688 = scmp.lt.s32.totalorder %s31, 1
          %s689 = scalar_select %p688, %s31, 1
          %s690 = scalar_lea.vmem %s7, %s689
        $region88: #{tpu_custom_call.1} parent=75 // pred_fallthru
          _
      $region76: #{tpu_custom_call.1} parent=5 // pred_fallthru
        _
    $region6: #{tpu_custom_call.1} parent=1 // loop_footer
      %s24 = sadd.s32 1, %s20
    $region7: #{tpu_custom_call.1} parent=1 // loop_footer_branch
      %19 = sbr.rel target = $region3
    $region8: #{tpu_custom_call.1} parent=1 // loop_exit
      _
    %691 = vsyncpa [#allocation5], 1
    %s692 = scalar_lea.sflag [#allocation5], 1
    %693 = vsyncpa %s692, 1
    %694 = vsyncpa [#allocation7], 1
    %s695 = scalar_lea.sflag [#allocation7], 1
    %696 = vsyncpa %s695, 1

</llo_original>
